<compile_context>
chip_gen: v7x
topology: tpu7x:2x2x1
jax: 0.10.0
libtpu: 0.0.40
codegen_flags: <defaults>
</compile_context>

<pallas_src>
import jax
import jax.numpy as jnp
from jax.experimental import pallas as pl
from jax.experimental.pallas import tpu as pltpu


def dc_bce_partial_kernel(x_ref, y_ref, o_ref):
    """x_ref, y_ref: (block_r, block_s) tiles.  o_ref: (block_r, 4) per-row accumulator,
    resident across the spatial grid axis (same block index for all j)."""
    j = pl.program_id(1)

    x = x_ref[...].astype(jnp.float32)
    y = y_ref[...].astype(jnp.float32)

    # Shared exp: e = exp(-|x|)
    e = jnp.exp(-jnp.abs(x))
    # Stable BCE-with-logits: max(x,0) - x*y + log1p(exp(-|x|))
    bce = jnp.maximum(x, 0.0) - x * y + jnp.log1p(e)
    # sigmoid(x) from the same e: x>=0 -> 1/(1+e), x<0 -> e/(1+e)
    recip = 1.0 / (1.0 + e)
    p = jnp.where(x >= 0.0, recip, e * recip)

    bce_row = jnp.sum(bce, axis=-1, keepdims=True)      # (block_r, 1)
    tp_row = jnp.sum(p * y, axis=-1, keepdims=True)
    sp_row = jnp.sum(p, axis=-1, keepdims=True)
    sy_row = jnp.sum(y, axis=-1, keepdims=True)
    stats = jnp.concatenate([bce_row, tp_row, sp_row, sy_row], axis=-1)  # (block_r, 4)

    @pl.when(j == 0)
    def _():
        o_ref[...] = jnp.zeros_like(o_ref)

    o_ref[...] = o_ref[...] + stats


def _largest_divisor(total, align, cap):
    """Largest d with d | total, d % align == 0, d <= cap; fallback: total."""
    best = None
    d = align
    limit = min(total, cap)
    while d <= limit:
        if total % d == 0:
            best = d
        d += align
    return best if best is not None else total


def dc_and_bce_loss(net_output, target, *, smooth=1.0):
    """net_output, target: (B, C, H, W) arrays (same shape, one-hot / region targets)."""
    B, C, H, W = net_output.shape
    S = H * W
    BC = B * C

    x2 = net_output.reshape(BC, S)   # keep native dtype; cast happens in-kernel
    y2 = target.reshape(BC, S)

    # Pad rows to a multiple of 8 (sublane) so row blocks tile cleanly.
    BC_pad = ((BC + 7) // 8) * 8
    if BC_pad != BC:
        x2 = jnp.pad(x2, ((0, BC_pad - BC), (0, 0)))
        y2 = jnp.pad(y2, ((0, BC_pad - BC), (0, 0)))

    # Tile selection: keep each per-input tile ~<= 2 MiB (x2 inputs x2 pipeline buffers
    # stays well under scoped VMEM on v5e/v6e/v7x).
    TARGET_TILE_BYTES = 2 * 1024 * 1024
    itemsize = jnp.dtype(net_output.dtype).itemsize
    if S % 128 == 0:
        cap_s = max(128, TARGET_TILE_BYTES // (8 * itemsize))
        block_s = _largest_divisor(S, 128, cap_s)
    else:
        block_s = S  # full-extent block is allowed when not 128-aligned
    cap_r = max(8, TARGET_TILE_BYTES // (block_s * itemsize))
    block_r = _largest_divisor(BC_pad, 8, cap_r)

    grid = (BC_pad // block_r, S // block_s)

    stats = pl.pallas_call(
        dc_bce_partial_kernel,
        out_shape=jax.ShapeDtypeStruct((BC_pad, 4), jnp.float32),
        grid=grid,
        in_specs=[
            pl.BlockSpec((block_r, block_s), lambda i, j: (i, j)),
            pl.BlockSpec((block_r, block_s), lambda i, j: (i, j)),
        ],
        out_specs=pl.BlockSpec((block_r, 4), lambda i, j: (i, 0)),
        compiler_params=pltpu.CompilerParams(
            dimension_semantics=("parallel", "arbitrary")),
    )(x2, y2)

    # Final scalar math on the tiny (BC, 4) stats tensor (drop padded rows).
    stats = stats[:BC]
    bce_sum = jnp.sum(stats[:, 0])
    tp = stats[:, 1]
    fp = stats[:, 2] - tp          # sum(p) - tp
    fn = stats[:, 3] - tp          # sum(y) - tp

    dc = (2.0 * tp + smooth) / (2.0 * tp + fp + fn + smooth + 1e-8)   # (BC,)
    ch = jnp.arange(BC) % C
    fg = (ch >= 1).astype(jnp.float32)
    # TODO(synk): if C == 1 this divides by zero, same as the PyTorch do_bg=False path.
    dc_mean = jnp.sum(dc * fg) / jnp.float32(B * (C - 1))

    ce_mean = bce_sum / jnp.float32(B * C * S)
    return ce_mean - dc_mean       # aggregate == 'sum' with dc_loss = -dc_mean


def _reference(net_output, target):
    # Pure-JAX reference mirroring the PyTorch module semantics.
    x = net_output.astype(jnp.float32)
    y = target.astype(jnp.float32)
    bce = jnp.mean(jnp.maximum(x, 0.0) - x * y + jnp.log1p(jnp.exp(-jnp.abs(x))))
    p = jax.nn.sigmoid(x)
    axes = (2, 3)
    tp = jnp.sum(p * y, axis=axes)
    fp = jnp.sum(p * (1.0 - y), axis=axes)
    fn = jnp.sum((1.0 - p) * y, axis=axes)
    dc = (2.0 * tp + 1.0) / (2.0 * tp + fp + fn + 1.0 + 1e-8)
    dc = dc[:, 1:].mean()
    return bce - dc


if __name__ == "__main__":
    key = jax.random.PRNGKey(0)
    k1, k2 = jax.random.split(key)
    B, C, H, W = 2, 4, 16, 16
    net_output = jax.random.normal(k1, (B, C, H, W), dtype=jnp.float32)  # raw logits
    target = (jax.random.uniform(k2, (B, C, H, W)) > 0.5).astype(jnp.float32)

    loss = dc_and_bce_loss(net_output, target)
    jax.block_until_ready(loss)

    ref = _reference(net_output, target)
    assert jnp.allclose(loss, ref, atol=1e-5, rtol=1e-5), (loss, ref)
    print("KERNEL_OK")
</pallas_src>

<mosaic_0001>
module attributes {stable_mosaic.version = 11 : i64} {
  func.func @dc_bce_partial_kernel(%arg0: i32, %arg1: i32, %arg2: memref<8x256xf32, #tpu.memory_space<vmem>>, %arg3: memref<8x256xf32, #tpu.memory_space<vmem>>, %arg4: memref<8x4xf32, #tpu.memory_space<vmem>>) attributes {dimension_semantics = [#tpu.dimension_semantics<parallel>, #tpu.dimension_semantics<arbitrary>], iteration_bounds = array<i64: 1, 1>, scalar_prefetch = 0 : i64, scratch_operands = 0 : i64, tpu.core_type = #tpu.core_type<tc>, window_params = [{transform_indices = @transform_0, window_bounds = array<i64: 8, 256>}, {transform_indices = @transform_1, window_bounds = array<i64: 8, 256>}, {transform_indices = @transform_2, window_bounds = array<i64: 8, 4>}]} {
    %c0 = arith.constant 0 : index
    %c0_0 = arith.constant 0 : index
    %0 = vector.load %arg2[%c0, %c0_0] : memref<8x256xf32, #tpu.memory_space<vmem>>, vector<8x256xf32>
    %c0_1 = arith.constant 0 : index
    %c0_2 = arith.constant 0 : index
    %1 = vector.load %arg3[%c0_1, %c0_2] : memref<8x256xf32, #tpu.memory_space<vmem>>, vector<8x256xf32>
    %2 = math.absf %0 : vector<8x256xf32>
    %cst = arith.constant 0.000000e+00 : f32
    %3 = vector.broadcast %cst : f32 to vector<8x256xf32>
    %4 = arith.subf %3, %2 : vector<8x256xf32>
    %5 = math.exp %4 : vector<8x256xf32>
    %cst_3 = arith.constant 0.000000e+00 : f32
    %6 = vector.broadcast %cst_3 : f32 to vector<8x256xf32>
    %7 = arith.maximumf %0, %6 : vector<8x256xf32>
    %8 = arith.mulf %0, %1 : vector<8x256xf32>
    %9 = arith.subf %7, %8 : vector<8x256xf32>
    %10 = math.log1p %5 : vector<8x256xf32>
    %11 = arith.addf %9, %10 : vector<8x256xf32>
    %cst_4 = arith.constant 1.000000e+00 : f32
    %12 = vector.broadcast %cst_4 : f32 to vector<8x256xf32>
    %13 = arith.addf %12, %5 : vector<8x256xf32>
    %cst_5 = arith.constant 1.000000e+00 : f32
    %14 = vector.broadcast %cst_5 : f32 to vector<8x256xf32>
    %15 = arith.divf %14, %13 : vector<8x256xf32>
    %cst_6 = arith.constant 0.000000e+00 : f32
    %16 = vector.broadcast %cst_6 : f32 to vector<8x256xf32>
    %17 = arith.cmpf oge, %0, %16 : vector<8x256xf32>
    %18 = arith.mulf %5, %15 : vector<8x256xf32>
    %19 = arith.select %17, %15, %18 : vector<8x256xi1>, vector<8x256xf32>
    %cst_7 = arith.constant dense<0.000000e+00> : vector<8xf32>
    %20 = vector.multi_reduction <add>, %11, %cst_7 [1] : vector<8x256xf32> to vector<8xf32>
    %21 = vector.shape_cast %20 : vector<8xf32> to vector<8x1xf32>
    %22 = arith.mulf %19, %1 : vector<8x256xf32>
    %cst_8 = arith.constant dense<0.000000e+00> : vector<8xf32>
    %23 = vector.multi_reduction <add>, %22, %cst_8 [1] : vector<8x256xf32> to vector<8xf32>
    %24 = vector.shape_cast %23 : vector<8xf32> to vector<8x1xf32>
    %cst_9 = arith.constant dense<0.000000e+00> : vector<8xf32>
    %25 = vector.multi_reduction <add>, %19, %cst_9 [1] : vector<8x256xf32> to vector<8xf32>
    %26 = vector.shape_cast %25 : vector<8xf32> to vector<8x1xf32>
    %cst_10 = arith.constant dense<0.000000e+00> : vector<8xf32>
    %27 = vector.multi_reduction <add>, %1, %cst_10 [1] : vector<8x256xf32> to vector<8xf32>
    %28 = vector.shape_cast %27 : vector<8xf32> to vector<8x1xf32>
    %29 = tpu.concatenate %21, %24, %26, %28 in 1 : vector<8x1xf32>, vector<8x1xf32>, vector<8x1xf32>, vector<8x1xf32> -> vector<8x4xf32>
    %c0_i32 = arith.constant 0 : i32
    %30 = arith.cmpi eq, %arg1, %c0_i32 : i32
    %31 = arith.extui %30 : i1 to i32
    %c0_i32_11 = arith.constant 0 : i32
    %32 = arith.cmpi ne, %31, %c0_i32_11 : i32
    scf.if %32 {
      %cst_16 = arith.constant 0.000000e+00 : f32
      %36 = vector.broadcast %cst_16 : f32 to vector<8x4xf32>
      %c0_17 = arith.constant 0 : index
      %c0_18 = arith.constant 0 : index
      %37 = vector.load %arg4[%c0_17, %c0_18] : memref<8x4xf32, #tpu.memory_space<vmem>>, vector<8x4xf32>
      tpu.vector_store %arg4[%c0_17, %c0_18], %36 {strides = array<i32>} : memref<8x4xf32, #tpu.memory_space<vmem>>, vector<8x4xf32>,
    } else {
    }
    %c0_12 = arith.constant 0 : index
    %c0_13 = arith.constant 0 : index
    %33 = vector.load %arg4[%c0_12, %c0_13] : memref<8x4xf32, #tpu.memory_space<vmem>>, vector<8x4xf32>
    %34 = arith.addf %33, %29 : vector<8x4xf32>
    %c0_14 = arith.constant 0 : index
    %c0_15 = arith.constant 0 : index
    %35 = vector.load %arg4[%c0_14, %c0_15] : memref<8x4xf32, #tpu.memory_space<vmem>>, vector<8x4xf32>
    tpu.vector_store %arg4[%c0_14, %c0_15], %34 {strides = array<i32>} : memref<8x4xf32, #tpu.memory_space<vmem>>, vector<8x4xf32>,
    return
  }
  func.func @transform_0(%arg0: i32, %arg1: i32) -> (i32, i32) {
    %c0_i32 = arith.constant 0 : i32
    return %arg0, %arg1 : i32, i32
  }
  func.func @transform_1(%arg0: i32, %arg1: i32) -> (i32, i32) {
    %c0_i32 = arith.constant 0 : i32
    return %arg0, %arg1 : i32, i32
  }
  func.func @transform_2(%arg0: i32, %arg1: i32) -> (i32, i32) {
    %c0_i32 = arith.constant 0 : i32
    %c0_i32_0 = arith.constant 0 : i32
    return %arg0, %c0_i32 : i32, i32
  }
}

</mosaic_0001>

<llo_original>
// kernel: tpu_custom_call.1
$region0: #{tpu_custom_call.1}
  #allocation0 [shape = 'u32[]', space=smem, size = 0x4, offset = 0x4, fixed_abs, tag = 'smem constant byte address 0x4 - core index']
  #allocation1 [shape = 'u32[144,128]{1,0:T(1,128)}', space=vmem, size = 0x12000, scoped, tag = 'internal scratch']
  %s0 = inlined_call_operand.hbm [shape: f32[8,256], index: 0, kind: input, shape index: {}]
  %s1 = inlined_call_operand.hbm [shape: f32[8,256], index: 1, kind: input, shape index: {}]
  %s2 = inlined_call_operand.vmem [shape: f32[8,4], index: 2, kind: output, shape index: {}]
  %s3 = sld [smem:[#allocation0]]
  $region30: #{tpu_custom_call.1} parent=0
    _
  %s5 = ssub.s32 1, %s3
  %s6 = scalar_select 0, %s5, %s3
  $region1: #{tpu_custom_call.1} parent=0
    #allocation2 [shape = 'u8[8192]{0}', space=vmem, size = 0x2000, scoped, tag = 'input window, operand 0, single buffered']
    #allocation3 [shape = 's32[1]{0}', space=sflag, size = 0x4, scoped, tag = 'scoped memory for tpu_custom_call.1']
    #allocation4 [shape = 'u8[8192]{0}', space=vmem, size = 0x2000, scoped, tag = 'input window, operand 1, single buffered']
    #allocation5 [shape = 's32[1]{0}', space=sflag, size = 0x4, scoped, tag = 'scoped memory for tpu_custom_call.1']
    %7 = vsyncpa [#allocation3], 0
    %8 = vsyncpa [#allocation5], 0
    // Predicated region
    $region2: #{tpu_custom_call.1} parent=1 // pred_check
      _
    $region3: #{tpu_custom_call.1} parent=1 // pred_check_branch
      %10 = sbr.rel (0) target = $region5
    $region4: #{tpu_custom_call.1} parent=1 // pred_region
      %s12 = ssub.s32 256, 256
      %13 = vsyncadd [#allocation3], %s12
      %s15 = sshll.u32 [#allocation2], 4
      %s16 = int_to_ptr.vmem [resolvable:$true] %s15
      %18 = dma.hbm_to_vmem [thread:$0]  %s0, 256, %s16, [#allocation3]
    $region5: #{tpu_custom_call.1} parent=1 // pred_fallthru
      _
    // Predicated region
    $region6: #{tpu_custom_call.1} parent=1 // pred_check
      _
    $region7: #{tpu_custom_call.1} parent=1 // pred_check_branch
      %20 = sbr.rel (0) target = $region9
    $region8: #{tpu_custom_call.1} parent=1 // pred_region
      %s22 = ssub.s32 256, 256
      %23 = vsyncadd [#allocation5], %s22
      %s25 = sshll.u32 [#allocation4], 4
      %s26 = int_to_ptr.vmem [resolvable:$true] %s25
      %28 = dma.hbm_to_vmem [thread:$0]  %s1, 256, %s26, [#allocation5]
    $region9: #{tpu_custom_call.1} parent=1 // pred_fallthru
      _
    // Predicated region
    $region10: #{tpu_custom_call.1} parent=1 // pred_check
      _
    $region11: #{tpu_custom_call.1} parent=1 // pred_check_branch
      %30 = sbr.rel (0) target = $region13
    $region12: #{tpu_custom_call.1} parent=1 // pred_region
      %31 = dma.done [#allocation3], 256
    $region13: #{tpu_custom_call.1} parent=1 // pred_fallthru
      _
    // Predicated region
    $region14: #{tpu_custom_call.1} parent=1 // pred_check
      _
    $region15: #{tpu_custom_call.1} parent=1 // pred_check_branch
      %33 = sbr.rel (0) target = $region17
    $region16: #{tpu_custom_call.1} parent=1 // pred_region
      %34 = dma.done [#allocation5], 256
    $region17: #{tpu_custom_call.1} parent=1 // pred_fallthru
      _
    %v35 = vld [vmem:[#allocation2] sm:$0xff]
    %v36 = vld [vmem:[#allocation2 + $0x8] sm:$0xff]
    %v37 = vld [vmem:[#allocation4] sm:$0xff]
    %v38 = vld [vmem:[#allocation4 + $0x8] sm:$0xff]
    %v39 = vand.u32 2147483647, %v35
    %v40 = vand.u32 2147483647, %v36
    %v41 = vsub.f32 0.0, %v39
    %v42 = vsub.f32 0.0, %v40
    %v43 = vmul.f32 %v41, 1.442695
    %v44 = vpow.pop %v43
    %v45 = vmul.f32 %v42, 1.442695
    %v46 = vpow.pop %v45
    %v47 = vmax.f32 %v35, 0.0
    %v48 = vmax.f32 %v36, 0.0
    %v49 = vmul.f32 %v35, %v37
    %v50 = vmul.f32 %v36, %v38
    %v51 = vsub.f32 %v47, %v49
    %v52 = vsub.f32 %v48, %v50
    %v53 = vadd.f32 %v44, 1.0
    %v54 = vlog2.pop %v53
    %v55 = vmul.f32 %v54, 0.6931472
    %v56 = vmul.f32 -0.5, %v44
    %v57 = vadd.f32 %v56, 1.0
    %v58 = vmul.f32 %v57, %v44
    %v59 = vand.u32 2147483647, %v44
    %vm60 = vcmp.lt.f32.partialorder %v59, 0.0004427343
    %v61 = vsel %vm60, %v58, %v55
    %v62 = vadd.f32 %v46, 1.0
    %v63 = vlog2.pop %v62
    %v64 = vmul.f32 %v63, 0.6931472
    %v65 = vmul.f32 -0.5, %v46
    %v66 = vadd.f32 %v65, 1.0
    %v67 = vmul.f32 %v66, %v46
    %v68 = vand.u32 2147483647, %v46
    %vm69 = vcmp.lt.f32.partialorder %v68, 0.0004427343
    %v70 = vsel %vm69, %v67, %v64
    %v71 = vadd.f32 %v51, %v61
    %v72 = vadd.f32 %v52, %v70
    %v73 = vadd.f32 %v44, 1.0
    %v74 = vadd.f32 %v46, 1.0
    %v75 = vrcp.pop %v73
    %v76 = vmul.f32 1.0, %v75
    %v77 = vrcp.pop %v74
    %v78 = vmul.f32 1.0, %v77
    %vm79 = vcmp.ge.f32.partialorder %v35, 0.0
    %vm80 = vcmp.ge.f32.partialorder %v36, 0.0
    %v81 = vmul.f32 %v44, %v76
    %v82 = vmul.f32 %v46, %v78
    %v83 = vsel %vm79, %v76, %v81
    %v84 = vsel %vm80, %v78, %v82
    %v85 = vadd.f32 %v71, %v72
    %86 = vadd.xlane.f32.xlu0 %v85
    %v87 = vpop.xlane.xlu0 %86
    %v88 = vmul.f32 %v83, %v37
    %v89 = vmul.f32 %v84, %v38
    %v90 = vadd.f32 %v88, %v89
    %91 = vadd.xlane.f32.xlu0 %v90
    %v92 = vpop.xlane.xlu0 %91
    %v93 = vadd.f32 %v83, %v84
    %94 = vadd.xlane.f32.xlu0 %v93
    %v95 = vpop.xlane.xlu0 %94
    %v96 = vadd.f32 %v37, %v38
    %97 = vadd.xlane.f32.xlu0 %v96
    %v98 = vpop.xlane.xlu0 %97
    %vm99 = vcmask 7168
    %v100 = vsel %vm99, %v87, %v92
    %vm101 = vcmask 15360
    %v102 = vsel %vm101, %v100, %v95
    %vm103 = vcmask 23552
    %v104 = vsel %vm103, %v102, %v98
    %p105 = scmp.eq.s32.totalorder 0, 0
    // Predicated region
    $region18: #{tpu_custom_call.1} parent=1 // pred_check
      %p106 = pneg %p105
    $region19: #{tpu_custom_call.1} parent=1 // pred_check_branch
      %108 = sbr.rel (%p106) target = $region21
    $region20: #{tpu_custom_call.1} parent=1 // pred_region
      %vm109 = vcmask 31744
      %110 = vst.msk [vmem:[%s2] sm:$0xff] %vm109, 0.0
    $region21: #{tpu_custom_call.1} parent=1 // pred_fallthru
      _
    %v111 = vld [vmem:[%s2] sm:$0xff]
    %v112 = vadd.f32 %v111, %v104
    %vm113 = vcmask 31744
    %114 = vst.msk [vmem:[%s2] sm:$0xff] %vm113, %v112
    // Predicated region
    $region22: #{tpu_custom_call.1} parent=1 // pred_check
      _
    $region23: #{tpu_custom_call.1} parent=1 // pred_check_branch
      %116 = sbr.rel (0) target = $region25
    $region24: #{tpu_custom_call.1} parent=1 // pred_region
      _
    $region25: #{tpu_custom_call.1} parent=1 // pred_fallthru
      _
    // Predicated region
    $region26: #{tpu_custom_call.1} parent=1 // pred_check
      _
    $region27: #{tpu_custom_call.1} parent=1 // pred_check_branch
      %118 = sbr.rel (0) target = $region29
    $region28: #{tpu_custom_call.1} parent=1 // pred_region
      _
    $region29: #{tpu_custom_call.1} parent=1 // pred_fallthru
      _
    %119 = vsyncpa [#allocation3], 1
    %120 = vsyncpa [#allocation5], 1

</llo_original>
